<compile_context>
chip_gen: v7x
topology: tpu7x:2x2x1
jax: 0.10.0
libtpu: 0.0.40
codegen_flags: <defaults>
</compile_context>

<pallas_src>
import functools

import jax
import jax.numpy as jnp
from jax.experimental import pallas as pl
from jax.experimental.pallas import tpu as pltpu

_MIB = 1024 * 1024
_SMALL_BYTES = 2 * _MIB       # below this, a single block is fine
_MIN_STEPS_LARGE = 4          # >= 2 grid steps per TensorCore on v7x


def _device_kind() -> str:
    try:
        return jax.devices()[0].device_kind.lower()
    except Exception:  # pragma: no cover - defensive
        return ""


def _default_block_bytes() -> int:
    kind = _device_kind()
    if "v5" in kind:
        return 3 * _MIB      # ~0.82 TB/s: 2-4 MiB already amortizes step cost
    if "v6" in kind:
        return 8 * _MIB      # 128 MiB VMEM, 1.4 TB/s
    if "v7" in kind:
        return 6 * _MIB      # 64 MiB VMEM/TC: keep 4x block <= ~24 MiB
    return 4 * _MIB


def _bf16_native() -> bool:
    kind = _device_kind()
    return ("v6" in kind) or ("v7" in kind)


def _temperature_tanh_kernel(x_ref, o_ref, *, inv_t, compute_dtype):
    # Elementwise hot path: scale on the VPU, tanh on the EUP.
    x = x_ref[...].astype(compute_dtype)
    o_ref[...] = jnp.tanh(x * inv_t).astype(o_ref.dtype)


def _launch_2d(x2d, *, dtype, inv_t, compute_dtype, target_block_bytes):
    rows, lane = x2d.shape
    itemsize = jnp.dtype(dtype).itemsize
    sublane = {4: 8, 2: 16, 1: 32}.get(itemsize, 8)
    total = rows * lane
    total_bytes = total * itemsize

    rows_per_block = max(1, target_block_bytes // (lane * itemsize))
    if rows_per_block >= rows and total_bytes <= _SMALL_BYTES:
        tile_rows = rows                                   # single full block
    else:
        tile_rows = min(rows_per_block, rows)
        if total_bytes > _SMALL_BYTES:
            # Guarantee >= _MIN_STEPS_LARGE grid steps: both v7x TensorCores
            # get work and the DMA pipeline stays busy.
            tile_rows = min(tile_rows, pl.cdiv(rows, _MIN_STEPS_LARGE))
        tile_rows = max(sublane, (tile_rows // sublane) * sublane)
        tile_rows = min(tile_rows, rows)

    tile_bytes = tile_rows * lane * itemsize
    # 2 buffers each for input + output (double-buffered) + headroom.
    vmem_limit = int(min(48 * _MIB, max(32 * _MIB, 4 * tile_bytes + 8 * _MIB)))

    grid = (pl.cdiv(rows, tile_rows),)
    cost = pl.CostEstimate(flops=total, transcendentals=total,
                           bytes_accessed=2 * total * itemsize)

    return pl.pallas_call(
        functools.partial(_temperature_tanh_kernel, inv_t=inv_t,
                          compute_dtype=compute_dtype),
        out_shape=jax.ShapeDtypeStruct((rows, lane), dtype),
        grid=grid,
        in_specs=[pl.BlockSpec((tile_rows, lane), lambda i: (i, 0))],
        out_specs=pl.BlockSpec((tile_rows, lane), lambda i: (i, 0)),
        compiler_params=pltpu.CompilerParams(
            dimension_semantics=("parallel",),
            vmem_limit_bytes=vmem_limit,
        ),
        cost_estimate=cost,
    )(x2d)


def temperature_tanh(x: jax.Array, temperature: float = 1.0,
                     *, target_block_bytes: int | None = None) -> jax.Array:
    assert temperature != 0.0, "temperature must be nonzero."
    dtype = x.dtype
    assert jnp.issubdtype(dtype, jnp.floating), (
        "TemperatureTanh expects a floating-point input.")
    orig_shape = x.shape
    total = int(x.size)
    if total == 0:
        return x

    if target_block_bytes is None:
        target_block_bytes = _default_block_bytes()

    inv_t = float(1.0 / temperature)
    # bf16-native math on chips with a bf16 VPU/EUP; f32 everywhere else
    # (v5e has no bf16 vector/transcendental path).
    if dtype == jnp.bfloat16 and _bf16_native():
        compute_dtype = jnp.bfloat16
    else:
        compute_dtype = jnp.float32

    itemsize = jnp.dtype(dtype).itemsize
    sublane = {4: 8, 2: 16, 1: 32}.get(itemsize, 8)

    rem = total % 128
    main = total - rem

    if main == 0:
        # Tiny (< 128 elements): not worth a kernel launch.
        return jnp.tanh(x.astype(compute_dtype) * inv_t).astype(dtype)

    x_flat = jnp.ravel(x)
    x_main = x_flat[:main] if rem else x_flat

    # Lane-dense (rows, lane) factorization of the 128-aligned prefix.
    # Prefer the widest lane that still yields a full sublane group of rows
    # (best vreg packing); otherwise take the widest divisor (a single
    # full-array block is legal and still lane-dense).
    candidates = (8192, 4096, 2048, 1024, 512, 256, 128)
    lane = next((c for c in candidates
                 if main % c == 0 and main // c >= sublane), None)
    if lane is None:
        lane = next(c for c in candidates if main % c == 0)

    rows = main // lane
    out_main = _launch_2d(x_main.reshape(rows, lane), dtype=dtype, inv_t=inv_t,
                          compute_dtype=compute_dtype,
                          target_block_bytes=target_block_bytes)

    if rem == 0:
        return out_main.reshape(orig_shape)

    # <=127-element tail handled on the VPU via XLA; no padded full-array copy.
    tail = jnp.tanh(x_flat[main:].astype(compute_dtype) * inv_t).astype(dtype)
    return jnp.concatenate([out_main.reshape(-1), tail]).reshape(orig_shape)


if __name__ == "__main__":
    key = jax.random.PRNGKey(0)
    temperature = 2.0

    # Main check: NCHW-like activation (batch=2, channels=4, 16x16).
    x = jax.random.normal(key, (2, 4, 16, 16), dtype=jnp.float32) * 3.0
    y = jax.block_until_ready(temperature_tanh(x, temperature))
    y_ref = jnp.tanh(x / temperature)
    assert y.shape == x.shape and y.dtype == x.dtype
    assert jnp.allclose(y, y_ref, atol=1e-6, rtol=1e-6)

    k1, k2, k3 = jax.random.split(key, 3)

    # Multi-step grid + ragged-last-block path (small block size).
    x2 = jax.random.normal(k1, (9, 2048), dtype=jnp.float32) * 2.0
    y2 = jax.block_until_ready(
        temperature_tanh(x2, temperature, target_block_bytes=64 * 1024))
    assert jnp.allclose(y2, jnp.tanh(x2 / temperature), atol=1e-6, rtol=1e-6)

    # Non-128-divisible path: kernel on aligned prefix + jnp tail (no padding copy).
    x3 = jax.random.normal(k2, (3, 5, 7, 11), dtype=jnp.float32)
    y3 = jax.block_until_ready(temperature_tanh(x3, temperature))
    assert jnp.allclose(y3, jnp.tanh(x3 / temperature), atol=1e-6, rtol=1e-6)

    # bf16 path (native bf16 math on v6e/v7x, f32 upcast elsewhere).
    x4 = (jax.random.normal(k3, (4, 8, 128), dtype=jnp.float32) * 2.0
          ).astype(jnp.bfloat16)
    y4 = jax.block_until_ready(temperature_tanh(x4, temperature))
    ref4 = jnp.tanh(x4.astype(jnp.float32) / temperature)
    assert y4.dtype == jnp.bfloat16
    assert jnp.allclose(y4.astype(jnp.float32), ref4, atol=2e-2, rtol=2e-2)

    print("KERNEL_OK")
</pallas_src>

<mosaic_0001>
module attributes {stable_mosaic.version = 11 : i64} {
  func.func @_temperature_tanh_kernel(%arg0: i32, %arg1: memref<8x256xf32, #tpu.memory_space<vmem>>, %arg2: memref<8x256xf32, #tpu.memory_space<vmem>>) attributes {dimension_semantics = [#tpu.dimension_semantics<parallel>], iteration_bounds = array<i64: 1>, scalar_prefetch = 0 : i64, scratch_operands = 0 : i64, tpu.core_type = #tpu.core_type<tc>, window_params = [{transform_indices = @transform_0, window_bounds = array<i64: 8, 256>}, {transform_indices = @transform_1, window_bounds = array<i64: 8, 256>}]} {
    %c0 = arith.constant 0 : index
    %c0_0 = arith.constant 0 : index
    %0 = vector.load %arg1[%c0, %c0_0] : memref<8x256xf32, #tpu.memory_space<vmem>>, vector<8x256xf32>
    %cst = arith.constant 5.000000e-01 : f32
    %1 = vector.broadcast %cst : f32 to vector<8x256xf32>
    %2 = arith.mulf %0, %1 : vector<8x256xf32>
    %3 = math.tanh %2 : vector<8x256xf32>
    %c0_1 = arith.constant 0 : index
    %c0_2 = arith.constant 0 : index
    %4 = vector.load %arg2[%c0_1, %c0_2] : memref<8x256xf32, #tpu.memory_space<vmem>>, vector<8x256xf32>
    tpu.vector_store %arg2[%c0_1, %c0_2], %3 {strides = array<i32>} : memref<8x256xf32, #tpu.memory_space<vmem>>, vector<8x256xf32>,
    return
  }
  func.func @transform_0(%arg0: i32) -> (i32, i32) {
    %c0_i32 = arith.constant 0 : i32
    %c0_i32_0 = arith.constant 0 : i32
    return %arg0, %c0_i32 : i32, i32
  }
  func.func @transform_1(%arg0: i32) -> (i32, i32) {
    %c0_i32 = arith.constant 0 : i32
    %c0_i32_0 = arith.constant 0 : i32
    return %arg0, %c0_i32 : i32, i32
  }
}

</mosaic_0001>

<llo_original>
// kernel: tpu_custom_call.1
$region0: #{tpu_custom_call.1}
  #allocation0 [shape = 'u32[]', space=smem, size = 0x4, offset = 0x4, fixed_abs, tag = 'smem constant byte address 0x4 - core index']
  #allocation1 [shape = 'u32[144,128]{1,0:T(1,128)}', space=vmem, size = 0x12000, scoped, tag = 'internal scratch']
  %s0 = inlined_call_operand.hbm [shape: f32[8,256], index: 0, kind: input, shape index: {}]
  %s1 = inlined_call_operand.hbm [shape: f32[8,256], index: 1, kind: output, shape index: {}]
  %s2 = sld [smem:[#allocation0]]
  $region18: #{tpu_custom_call.1} parent=0
    _
  %s4 = ssub.s32 1, %s2
  %s5 = scalar_select 0, %s4, %s2
  $region1: #{tpu_custom_call.1} parent=0
    #allocation2 [shape = 'u8[8192]{0}', space=vmem, size = 0x2000, scoped, tag = 'input window, operand 0, single buffered']
    #allocation3 [shape = 's32[1]{0}', space=sflag, size = 0x4, scoped, tag = 'scoped memory for tpu_custom_call.1']
    #allocation4 [shape = 's32[1]{0}', space=sflag, size = 0x4, scoped, tag = 'scoped memory for tpu_custom_call.1']
    #allocation5 [shape = 'u8[8192]{0}', space=vmem, size = 0x2000, scoped, tag = 'output window, operand 0, single buffered']
    %6 = vsyncpa [#allocation3], 0
    %7 = vsyncpa [#allocation4], 0
    // Predicated region
    $region2: #{tpu_custom_call.1} parent=1 // pred_check
      _
    $region3: #{tpu_custom_call.1} parent=1 // pred_check_branch
      %9 = sbr.rel (0) target = $region5
    $region4: #{tpu_custom_call.1} parent=1 // pred_region
      %s11 = ssub.s32 256, 256
      %12 = vsyncadd [#allocation3], %s11
      %s14 = sshll.u32 [#allocation2], 4
      %s15 = int_to_ptr.vmem [resolvable:$true] %s14
      %17 = dma.hbm_to_vmem [thread:$0]  %s0, 256, %s15, [#allocation3]
    $region5: #{tpu_custom_call.1} parent=1 // pred_fallthru
      _
    // Predicated region
    $region6: #{tpu_custom_call.1} parent=1 // pred_check
      _
    $region7: #{tpu_custom_call.1} parent=1 // pred_check_branch
      %19 = sbr.rel (0) target = $region9
    $region8: #{tpu_custom_call.1} parent=1 // pred_region
      %20 = dma.done [#allocation3], 256
    $region9: #{tpu_custom_call.1} parent=1 // pred_fallthru
      _
    %v21 = vld [vmem:[#allocation2] sm:$0xff]
    %v22 = vld [vmem:[#allocation2 + $0x8] sm:$0xff]
    %v23 = vmul.f32 %v21, 0.5
    %v24 = vmul.f32 %v22, 0.5
    %v25 = vtanh.pop %v23
    %v26 = vtanh.pop %v24
    %27 = vst [vmem:[#allocation5] sm:$0xff] %v25
    %28 = vst [vmem:[#allocation5 + $0x8] sm:$0xff] %v26
    // Predicated region
    $region10: #{tpu_custom_call.1} parent=1 // pred_check
      _
    $region11: #{tpu_custom_call.1} parent=1 // pred_check_branch
      %30 = sbr.rel (0) target = $region13
    $region12: #{tpu_custom_call.1} parent=1 // pred_region
      %s32 = ssub.s32 256, 256
      %33 = vsyncadd [#allocation4], %s32
      %s35 = sshll.u32 [#allocation5], 4
      %s36 = int_to_ptr.vmem [resolvable:$true] %s35
      %38 = dma.vmem_to_hbm [thread:$0]  %s36, 256, %s1, [#allocation4]
    $region13: #{tpu_custom_call.1} parent=1 // pred_fallthru
      _
    // Predicated region
    $region14: #{tpu_custom_call.1} parent=1 // pred_check
      _
    $region15: #{tpu_custom_call.1} parent=1 // pred_check_branch
      %40 = sbr.rel (0) target = $region17
    $region16: #{tpu_custom_call.1} parent=1 // pred_region
      %41 = dma.done [#allocation4], 256
    $region17: #{tpu_custom_call.1} parent=1 // pred_fallthru
      _
    %42 = vsyncpa [#allocation3], 1
    %43 = vsyncpa [#allocation4], 1

</llo_original>
